<compile_context>
chip_gen: v7x
topology: tpu7x:2x2x1
jax: 0.10.0
libtpu: 0.0.40
codegen_flags: <defaults>
</compile_context>

<pallas_src>
import functools

import jax
import jax.numpy as jnp
from jax.experimental import pallas as pl
from jax.experimental.pallas import tpu as pltpu


def _round_up(x, m):
    return ((x + m - 1) // m) * m


def _cdiv(a, b):
    return -(-a // b)


def _vmem_budget_bytes():
    """~75% of per-core VMEM capacity (conservative fallback: 64 MiB parts)."""
    try:
        cap = int(pltpu.get_tpu_info().vmem_capacity_bytes)
    except Exception:
        cap = 64 * 2 ** 20
    return (cap * 3) // 4


# ---------------------------------------------------------------------------
# stride == 1 fast path: direct 3x3 conv as ONE fused (Cout, 9*Cin_p) @ (9*Cin_p, L)
# matmul per spatial tile; lane-dense bf16 output; BN + ReLU in the f32 epilogue.
# ---------------------------------------------------------------------------
def _make_direct_conv_kernel(wp, l, r_tiles):
    offsets = tuple(kh * wp + kw for kh in range(3) for kw in range(3))

    def kernel(x_ref, w_ref, scale_ref, shift_ref, o_ref):
        # x_ref:     (Cin_p, Mflat)   whole padded, flattened image (bf16)
        # w_ref:     (Cout, 9*Cin_p)  unscaled conv weight, taps along K (bf16)
        # scale_ref: (Cout, 1) f32    BN scale  (gamma / sqrt(var + eps))
        # shift_ref: (Cout, 1) f32    BN shift  (beta - mean * scale)
        # o_ref:     (Cout, L)        bf16, lane-dense (L % 128 == 0)
        if r_tiles == 1:
            base = 0                                       # fully static slicing
        else:
            base = pl.multiple_of(pl.program_id(1) * l, 128)
        # Build the (9*Cin_p, L) RHS by concatenating the 9 shifted Ref slices along
        # sublanes (tile-aligned because Cin_p is a multiple of the sublane tile),
        # then one big-K MXU matmul with f32 accumulation.
        xk = jnp.concatenate(
            [x_ref[:, pl.ds(base + off, l)] for off in offsets], axis=0)
        acc = jnp.dot(w_ref[...], xk, preferred_element_type=jnp.float32)
        y = acc * scale_ref[...] + shift_ref[...]
        o_ref[...] = jnp.maximum(y, 0.0).astype(o_ref.dtype)

    return kernel


def _conv_bn_relu_stride1(x, weight, scale, shift, compute_dtype):
    n, cin, h, w = x.shape
    cout = weight.shape[0]
    wp = w + 2                         # padded width
    m_valid = h * wp                   # per-image "wide" output length (rows * Wp)
    itemsize = jnp.dtype(compute_dtype).itemsize
    # pad Cin to the sublane tile of the compute dtype so the in-kernel concat
    # along sublanes is tile-aligned (16 for bf16, 8 for f32)
    sub_tile = 8 * (4 // itemsize)
    cin_p = _round_up(cin, sub_tile)
    slack = _round_up(2 * wp + 2, 128)  # max tap offset (kh*Wp + kw), lane-rounded

    # --- choose the lane tile L under the VMEM budget ------------------------
    budget = _vmem_budget_bytes()
    l_target = 4096 if budget <= 48 * 2 ** 20 else 8192
    l = min(l_target, _round_up(m_valid, 128))

    def _vmem_need(l_, r_):
        mflat_ = r_ * l_ + slack
        return (2 * cin_p * mflat_ * itemsize        # x image (double-buffered)
                + 2 * cout * l_ * itemsize           # out tiles (double-buffered)
                + 2 * cout * 9 * cin_p * itemsize    # weight
                + 9 * cin_p * l_ * itemsize          # concatenated RHS
                + cout * l_ * 4                      # f32 accumulator
                + 4 * cout * 4)                      # scale / shift

    while True:
        r_tiles = _cdiv(m_valid, l)
        if _vmem_need(l, r_tiles) + (4 << 20) <= budget or l <= 128:
            break
        l = max(128, _round_up(l // 2, 128))

    # keep both TensorCores busy on 2-TC parts when the grid would be 1x1
    if n * r_tiles < 2 and m_valid > 128:
        l = max(128, _round_up(_cdiv(m_valid, 2), 128))
        r_tiles = _cdiv(m_valid, l)

    m_img = r_tiles * l
    mflat = m_img + slack
    vmem_limit = int(min(budget, max(_vmem_need(l, r_tiles) + (8 << 20), 16 << 20)))

    # --- operand prep (one fused pad + cast pass over x; no window stacking) --
    xp = jnp.pad(x.astype(compute_dtype),
                 ((0, 0), (0, cin_p - cin), (1, 1), (1, 1)))
    xflat = xp.reshape(n, cin_p, (h + 2) * wp)
    xflat = jnp.pad(xflat, ((0, 0), (0, 0), (0, mflat - xflat.shape[-1])))

    w_pad = jnp.pad(weight, ((0, 0), (0, cin_p - cin), (0, 0), (0, 0)))
    w2d = (jnp.transpose(w_pad, (0, 2, 3, 1))            # (Cout, 3, 3, Cin_p)
           .reshape(cout, 9 * cin_p).astype(compute_dtype))
    scale_col = scale.reshape(cout, 1).astype(jnp.float32)
    shift_col = shift.reshape(cout, 1).astype(jnp.float32)

    out_wide = pl.pallas_call(
        _make_direct_conv_kernel(wp, l, r_tiles),
        out_shape=jax.ShapeDtypeStruct((n, cout, m_img), compute_dtype),
        grid_spec=pltpu.PrefetchScalarGridSpec(
            num_scalar_prefetch=0,
            grid=(n, r_tiles),
            in_specs=[
                # whole image per batch index; block index changes only with i,
                # so Pallas skips the re-DMA across the r axis (no overlap bytes).
                pl.BlockSpec((None, cin_p, mflat), lambda i, r: (i, 0, 0)),
                pl.BlockSpec((cout, 9 * cin_p), lambda i, r: (0, 0)),
                pl.BlockSpec((cout, 1), lambda i, r: (0, 0)),
                pl.BlockSpec((cout, 1), lambda i, r: (0, 0)),
            ],
            out_specs=pl.BlockSpec((None, cout, l), lambda i, r: (i, 0, r)),
        ),
        compiler_params=pltpu.CompilerParams(
            dimension_semantics=("parallel", "parallel"),
            vmem_limit_bytes=vmem_limit,
        ),
    )(xflat, w2d, scale_col, shift_col)

    # The wide output is row-major over Wp columns and Cout-major, i.e. already
    # NCHW-flat; one crop (reads bf16) drops the padding columns, cast to f32.
    out = out_wide[:, :, :m_valid].reshape(n, cout, h, wp)[:, :, :, :w]
    return out.astype(jnp.float32)


# ---------------------------------------------------------------------------
# stride > 1 fallback (not exercised by the self-test): im2col with K on sublanes
# and the spatial axis on lanes (lane-dense stores), BN + ReLU in the epilogue.
# ---------------------------------------------------------------------------
def _strided_matmul_kernel(p_ref, w_ref, scale_ref, shift_ref, o_ref):
    acc = jnp.dot(w_ref[...], p_ref[...], preferred_element_type=jnp.float32)
    y = acc * scale_ref[...] + shift_ref[...]
    o_ref[...] = jnp.maximum(y, 0.0).astype(o_ref.dtype)


def _conv_bn_relu_strided(x, weight, scale, shift, stride, compute_dtype):
    # TODO(synk): stride > 1 still materializes a 9x im2col in XLA before the Pallas
    # matmul; only the stride == 1 path is fully fused inside the kernel.
    n, cin, h, w = x.shape
    cout = weight.shape[0]
    h_out = (h + 2 - 3) // stride + 1
    w_out = (w + 2 - 3) // stride + 1
    m = h_out * w_out

    xp = jnp.pad(x.astype(compute_dtype), ((0, 0), (0, 0), (1, 1), (1, 1)))
    taps = [xp[:, :, kh: kh + stride * h_out: stride,
               kw: kw + stride * w_out: stride]
            for kh in range(3) for kw in range(3)]
    patches = jnp.concatenate(taps, axis=1).reshape(n, 9 * cin, m)

    tl = min(4096, _round_up(m, 128))
    m_pad = _round_up(m, tl)
    if m_pad != m:
        patches = jnp.pad(patches, ((0, 0), (0, 0), (0, m_pad - m)))

    w2d = (jnp.transpose(weight, (0, 2, 3, 1)).reshape(cout, 9 * cin)
           .astype(compute_dtype))
    scale_col = scale.reshape(cout, 1).astype(jnp.float32)
    shift_col = shift.reshape(cout, 1).astype(jnp.float32)

    out_flat = pl.pallas_call(
        _strided_matmul_kernel,
        out_shape=jax.ShapeDtypeStruct((n, cout, m_pad), compute_dtype),
        grid_spec=pltpu.PrefetchScalarGridSpec(
            num_scalar_prefetch=0,
            grid=(n, m_pad // tl),
            in_specs=[
                pl.BlockSpec((None, 9 * cin, tl), lambda i, t: (i, 0, t)),
                pl.BlockSpec((cout, 9 * cin), lambda i, t: (0, 0)),
                pl.BlockSpec((cout, 1), lambda i, t: (0, 0)),
                pl.BlockSpec((cout, 1), lambda i, t: (0, 0)),
            ],
            out_specs=pl.BlockSpec((None, cout, tl), lambda i, t: (i, 0, t)),
        ),
        compiler_params=pltpu.CompilerParams(
            dimension_semantics=("parallel", "parallel"),
            vmem_limit_bytes=int(min(_vmem_budget_bytes(), 64 * 2 ** 20)),
        ),
    )(patches, w2d, scale_col, shift_col)

    out = out_flat[:, :, :m].reshape(n, cout, h_out, w_out)
    return out.astype(jnp.float32)


# ---------------------------------------------------------------------------
# public forward
# ---------------------------------------------------------------------------
@functools.partial(jax.jit, static_argnames=("stride", "compute_dtype"))
def conv_bn_m_forward(x, weight, gamma, beta, running_mean, running_var,
                      stride=1, eps=1e-5, compute_dtype=jnp.bfloat16):
    """Forward of _conv_bn_m: Conv2d(3x3, stride, pad=1, bias=False) -> BN(eval) -> ReLU.

    x: (N, Cin, H, W) NCHW; weight: (Cout, Cin, 3, 3). Returns NCHW float32.
    """
    scale = gamma / jnp.sqrt(running_var + eps)        # (Cout,)
    shift = beta - running_mean * scale                # (Cout,)
    if stride == 1:
        return _conv_bn_relu_stride1(x, weight, scale, shift, compute_dtype)
    return _conv_bn_relu_strided(x, weight, scale, shift, stride, compute_dtype)


def _reference(x, weight, gamma, beta, running_mean, running_var, stride, eps=1e-5):
    y = jax.lax.conv_general_dilated(
        x, weight, window_strides=(stride, stride), padding=((1, 1), (1, 1)),
        dimension_numbers=("NCHW", "OIHW", "NCHW"))
    scale = gamma / jnp.sqrt(running_var + eps)
    shift = beta - running_mean * scale
    y = y * scale[None, :, None, None] + shift[None, :, None, None]
    return jnp.maximum(y, 0.0)


if __name__ == "__main__":
    # small shapes consistent with the module: inp=4, oup=8, stride=1
    N, Cin, H, W = 2, 4, 16, 16
    Cout, stride = 8, 1

    key = jax.random.PRNGKey(0)
    kx, kw, kg, kb, km, kv = jax.random.split(key, 6)

    x = jax.random.normal(kx, (N, Cin, H, W), dtype=jnp.float32)
    weight = jax.random.normal(kw, (Cout, Cin, 3, 3), dtype=jnp.float32) * 0.1
    gamma = 1.0 + 0.1 * jax.random.normal(kg, (Cout,), dtype=jnp.float32)
    beta = 0.1 * jax.random.normal(kb, (Cout,), dtype=jnp.float32)
    running_mean = 0.1 * jax.random.normal(km, (Cout,), dtype=jnp.float32)
    running_var = jnp.abs(1.0 + 0.1 * jax.random.normal(kv, (Cout,), dtype=jnp.float32))

    out = conv_bn_m_forward(x, weight, gamma, beta, running_mean, running_var,
                            stride=stride)
    out = jax.block_until_ready(out)

    ref = _reference(x, weight, gamma, beta, running_mean, running_var, stride)
    assert out.shape == (N, Cout, H, W), out.shape
    err = float(jnp.max(jnp.abs(out - ref)))
    # x / weights stream as bf16 (f32 accumulation), so allow a bf16-level tolerance
    assert err < 3e-2, err

    print("KERNEL_OK")
</pallas_src>

<mosaic_0001>
module attributes {stable_mosaic.version = 11 : i64} {
  func.func @kernel(%arg0: i32, %arg1: i32, %arg2: memref<1x16x512xbf16, #tpu.memory_space<vmem>>, %arg3: memref<8x144xbf16, #tpu.memory_space<vmem>>, %arg4: memref<8x1xf32, #tpu.memory_space<vmem>>, %arg5: memref<8x1xf32, #tpu.memory_space<vmem>>, %arg6: memref<1x8x384xbf16, #tpu.memory_space<vmem>>) attributes {dimension_semantics = [#tpu.dimension_semantics<parallel>, #tpu.dimension_semantics<parallel>], iteration_bounds = array<i64: 2, 1>, scalar_prefetch = 0 : i64, scratch_operands = 0 : i64, tpu.core_type = #tpu.core_type<tc>, window_params = [{transform_indices = @transform_0, window_bounds = array<i64: 1, 16, 512>}, {pipeline_mode = #tpu.pipeline_mode<synchronous>, transform_indices = @transform_1, window_bounds = array<i64: 8, 144>}, {pipeline_mode = #tpu.pipeline_mode<synchronous>, transform_indices = @transform_2, window_bounds = array<i64: 8, 1>}, {pipeline_mode = #tpu.pipeline_mode<synchronous>, transform_indices = @transform_3, window_bounds = array<i64: 8, 1>}, {transform_indices = @transform_4, window_bounds = array<i64: 1, 8, 384>}]} {
    %c0 = arith.constant 0 : index
    %c0_0 = arith.constant 0 : index
    %c0_1 = arith.constant 0 : index
    %0 = vector.load %arg2[%c0, %c0_0, %c0_1] : memref<1x16x512xbf16, #tpu.memory_space<vmem>>, vector<1x16x384xbf16>
    %1 = vector.shape_cast %0 : vector<1x16x384xbf16> to vector<16x384xbf16>
    %c0_2 = arith.constant 0 : index
    %c0_3 = arith.constant 0 : index
    %c1 = arith.constant 1 : index
    %2 = vector.load %arg2[%c0_2, %c0_3, %c1] : memref<1x16x512xbf16, #tpu.memory_space<vmem>>, vector<1x16x384xbf16>
    %3 = vector.shape_cast %2 : vector<1x16x384xbf16> to vector<16x384xbf16>
    %c0_4 = arith.constant 0 : index
    %c0_5 = arith.constant 0 : index
    %c2 = arith.constant 2 : index
    %4 = vector.load %arg2[%c0_4, %c0_5, %c2] : memref<1x16x512xbf16, #tpu.memory_space<vmem>>, vector<1x16x384xbf16>
    %5 = vector.shape_cast %4 : vector<1x16x384xbf16> to vector<16x384xbf16>
    %c0_6 = arith.constant 0 : index
    %c0_7 = arith.constant 0 : index
    %c18 = arith.constant 18 : index
    %6 = vector.load %arg2[%c0_6, %c0_7, %c18] : memref<1x16x512xbf16, #tpu.memory_space<vmem>>, vector<1x16x384xbf16>
    %7 = vector.shape_cast %6 : vector<1x16x384xbf16> to vector<16x384xbf16>
    %c0_8 = arith.constant 0 : index
    %c0_9 = arith.constant 0 : index
    %c19 = arith.constant 19 : index
    %8 = vector.load %arg2[%c0_8, %c0_9, %c19] : memref<1x16x512xbf16, #tpu.memory_space<vmem>>, vector<1x16x384xbf16>
    %9 = vector.shape_cast %8 : vector<1x16x384xbf16> to vector<16x384xbf16>
    %c0_10 = arith.constant 0 : index
    %c0_11 = arith.constant 0 : index
    %c20 = arith.constant 20 : index
    %10 = vector.load %arg2[%c0_10, %c0_11, %c20] : memref<1x16x512xbf16, #tpu.memory_space<vmem>>, vector<1x16x384xbf16>
    %11 = vector.shape_cast %10 : vector<1x16x384xbf16> to vector<16x384xbf16>
    %c0_12 = arith.constant 0 : index
    %c0_13 = arith.constant 0 : index
    %c36 = arith.constant 36 : index
    %12 = vector.load %arg2[%c0_12, %c0_13, %c36] : memref<1x16x512xbf16, #tpu.memory_space<vmem>>, vector<1x16x384xbf16>
    %13 = vector.shape_cast %12 : vector<1x16x384xbf16> to vector<16x384xbf16>
    %c0_14 = arith.constant 0 : index
    %c0_15 = arith.constant 0 : index
    %c37 = arith.constant 37 : index
    %14 = vector.load %arg2[%c0_14, %c0_15, %c37] : memref<1x16x512xbf16, #tpu.memory_space<vmem>>, vector<1x16x384xbf16>
    %15 = vector.shape_cast %14 : vector<1x16x384xbf16> to vector<16x384xbf16>
    %c0_16 = arith.constant 0 : index
    %c0_17 = arith.constant 0 : index
    %c38 = arith.constant 38 : index
    %16 = vector.load %arg2[%c0_16, %c0_17, %c38] : memref<1x16x512xbf16, #tpu.memory_space<vmem>>, vector<1x16x384xbf16>
    %17 = vector.shape_cast %16 : vector<1x16x384xbf16> to vector<16x384xbf16>
    %18 = tpu.concatenate %1, %3, %5, %7, %9, %11, %13, %15, %17 in 0 : vector<16x384xbf16>, vector<16x384xbf16>, vector<16x384xbf16>, vector<16x384xbf16>, vector<16x384xbf16>, vector<16x384xbf16>, vector<16x384xbf16>, vector<16x384xbf16>, vector<16x384xbf16> -> vector<144x384xbf16>
    %c0_18 = arith.constant 0 : index
    %c0_19 = arith.constant 0 : index
    %19 = vector.load %arg3[%c0_18, %c0_19] : memref<8x144xbf16, #tpu.memory_space<vmem>>, vector<8x144xbf16>
    %cst = arith.constant dense<0.000000e+00> : vector<8x384xf32>
    %20 = tpu.matmul %19, %18, %cst {dimension_numbers = #tpu.dot_dimension_numbers<[1], [0], [0], [1], [0, 0, 1, 1], [], []>} : vector<8x144xbf16>, vector<144x384xbf16>, vector<8x384xf32> -> vector<8x384xf32>
    %c0_20 = arith.constant 0 : index
    %c0_21 = arith.constant 0 : index
    %21 = vector.load %arg4[%c0_20, %c0_21] : memref<8x1xf32, #tpu.memory_space<vmem>>, vector<8x1xf32>
    %22 = vector.broadcast %21 : vector<8x1xf32> to vector<8x384xf32>
    %23 = arith.mulf %20, %22 : vector<8x384xf32>
    %c0_22 = arith.constant 0 : index
    %c0_23 = arith.constant 0 : index
    %24 = vector.load %arg5[%c0_22, %c0_23] : memref<8x1xf32, #tpu.memory_space<vmem>>, vector<8x1xf32>
    %25 = vector.broadcast %24 : vector<8x1xf32> to vector<8x384xf32>
    %26 = arith.addf %23, %25 : vector<8x384xf32>
    %cst_24 = arith.constant 0.000000e+00 : f32
    %27 = vector.broadcast %cst_24 : f32 to vector<8x384xf32>
    %28 = arith.maximumf %26, %27 : vector<8x384xf32>
    %29 = arith.truncf %28 : vector<8x384xf32> to vector<8x384xbf16>
    %c0_25 = arith.constant 0 : index
    %c0_26 = arith.constant 0 : index
    %c0_27 = arith.constant 0 : index
    %30 = vector.load %arg6[%c0_25, %c0_26, %c0_27] : memref<1x8x384xbf16, #tpu.memory_space<vmem>>, vector<1x8x384xbf16>
    %31 = vector.shape_cast %30 : vector<1x8x384xbf16> to vector<8x384xbf16>
    %32 = vector.shape_cast %29 : vector<8x384xbf16> to vector<1x8x384xbf16>
    tpu.vector_store %arg6[%c0_25, %c0_26, %c0_27], %32 {strides = array<i32>} : memref<1x8x384xbf16, #tpu.memory_space<vmem>>, vector<1x8x384xbf16>,
    return
  }
  func.func @transform_0(%arg0: i32, %arg1: i32) -> (i32, i32, i32) {
    %c0_i32 = arith.constant 0 : i32
    %c0_i32_0 = arith.constant 0 : i32
    %c0_i32_1 = arith.constant 0 : i32
    return %arg0, %c0_i32, %c0_i32_0 : i32, i32, i32
  }
  func.func @transform_1(%arg0: i32, %arg1: i32) -> (i32, i32) {
    %c0_i32 = arith.constant 0 : i32
    %c0_i32_0 = arith.constant 0 : i32
    %c0_i32_1 = arith.constant 0 : i32
    return %c0_i32, %c0_i32_0 : i32, i32
  }
  func.func @transform_2(%arg0: i32, %arg1: i32) -> (i32, i32) {
    %c0_i32 = arith.constant 0 : i32
    %c0_i32_0 = arith.constant 0 : i32
    %c0_i32_1 = arith.constant 0 : i32
    return %c0_i32, %c0_i32_0 : i32, i32
  }
  func.func @transform_3(%arg0: i32, %arg1: i32) -> (i32, i32) {
    %c0_i32 = arith.constant 0 : i32
    %c0_i32_0 = arith.constant 0 : i32
    %c0_i32_1 = arith.constant 0 : i32
    return %c0_i32, %c0_i32_0 : i32, i32
  }
  func.func @transform_4(%arg0: i32, %arg1: i32) -> (i32, i32, i32) {
    %c0_i32 = arith.constant 0 : i32
    %c0_i32_0 = arith.constant 0 : i32
    return %arg0, %c0_i32, %arg1 : i32, i32, i32
  }
}

</mosaic_0001>

<llo_original>
// kernel: conv_bn_m_forward.1
$region0: #{conv_bn_m_forward.1}
  #allocation0 [shape = 'u32[]', space=smem, size = 0x4, offset = 0x4, fixed_abs, tag = 'smem constant byte address 0x4 - core index']
  #allocation1 [shape = 'u32[144,128]{1,0:T(1,128)}', space=vmem, size = 0x12000, scoped, tag = 'internal scratch']
  %s0 = inlined_call_operand.vmem [shape: bf16[2,16,512], index: 0, kind: input, shape index: {}]
  %s1 = inlined_call_operand.vmem [shape: bf16[8,144], index: 1, kind: input, shape index: {}]
  %s2 = inlined_call_operand.vmem [shape: f32[8,1], index: 2, kind: input, shape index: {}]
  %s3 = inlined_call_operand.vmem [shape: f32[8,1], index: 3, kind: input, shape index: {}]
  %s4 = inlined_call_operand.vmem [shape: bf16[2,8,384], index: 4, kind: output, shape index: {}]
  %s5 = sld [smem:[#allocation0]]
  $region49: #{conv_bn_m_forward.1} parent=0
    _
  %s7 = ssub.s32 1, %s5
  %s8 = scalar_select 0, %s7, %s5
  loop: start=0, step=1, limit=4
  $region2: #{conv_bn_m_forward.1} parent=0 // loop_pre_header
    _
  $region3: #{conv_bn_m_forward.1} parent=0 // loop_header
    %s10 = sphi 0, %s14
    %p11 = scmp.ge.s32.totalorder %s10, 4
    %s17 = sphi 0, %s29
    %s18 = sphi 0, %s25
    %s19 = sphi 0, %s17
    %s20 = sphi 0, %s18
    %s21 = sphi 0, %s19
    %s22 = sphi 0, %s20
    %s32 = sphi 0, %s34
    %s35 = sphi 0, %s32
    %s36 = sphi 0, %s35
    %s52 = sphi 0, %s36
    %s56 = sphi 0, %s56
    %s58 = sphi 0, %s56
    %s59 = sphi 0, %s58
    %s73 = sphi 0, %s59
    %s77 = sphi 0, %s77
    %s79 = sphi 0, %s77
    %s80 = sphi 0, %s79
    %s94 = sphi 0, %s80
    %s98 = sphi 0, %s98
    %s100 = sphi 0, %s98
    %s101 = sphi 0, %s100
    %s115 = sphi 0, %s101
    %s123 = sphi 0, %s125
    %s126 = sphi 0, %s123
    %s127 = sphi 0, %s126
    %s143 = sphi 0, %s127
  $region4: #{conv_bn_m_forward.1} parent=0 // loop_header_branch
    %13 = sbr.rel (%p11) target = $region8
  $region5: #{conv_bn_m_forward.1} parent=0 // loop_body
    %s15 = ssub.s32 %s10, 1
    %s16 = ssub.s32 %s10, 2
    %s23 = sadd.s32 1, %s18
    %p24 = scmp.ge.s32.totalorder %s23, 1
    %s25 = scalar_select %p24, 0, %s23
    %s26 = sadd.s32 1, %s17
    %s27 = scalar_select %p24, %s26, %s17
    %p28 = scmp.ge.s32.totalorder %s27, 2
    %s29 = scalar_select %p28, 0, %s27
    %s30 = ssub.s32 %s17, %s29
    %p31 = scmp.eq.s32.totalorder %s30, 0
    %s33 = sadd.s32 %s32, 1
    %s34 = scalar_select %p31, %s32, %s33
    %p37 = pneg %p31
    %p38 = scmp.eq.s32.totalorder %s10, 1
    %p39 = por %p37, %p38
    %p40 = scmp.ne.s32.totalorder %s32, %s35
    %p41 = scmp.eq.s32.totalorder %s10, 0
    %p42 = por %p40, %p41
    %p43 = scmp.ne.s32.totalorder %s32, %s35
    %p44 = scmp.eq.s32.totalorder %s15, 1
    %p45 = por %p43, %p44
    %p46 = scmp.ne.s32.totalorder %s35, %s36
    %p47 = scmp.eq.s32.totalorder %s15, 0
    %p48 = por %p46, %p47
    %p49 = scmp.ne.s32.totalorder %s35, %s36
    %p50 = scmp.eq.s32.totalorder %s16, 1
    %p51 = por %p49, %p50
    %p53 = scmp.ne.s32.totalorder %s36, %s52
    %p54 = scmp.eq.s32.totalorder %s16, 0
    %p55 = por %p53, %p54
    %s57 = sadd.s32 %s56, 1
    %p60 = scmp.eq.s32.totalorder %s10, 1
    %p61 = scmp.ne.s32.totalorder %s56, %s58
    %p62 = scmp.eq.s32.totalorder %s10, 0
    %p63 = por %p61, %p62
    %p64 = scmp.ne.s32.totalorder %s56, %s58
    %p65 = scmp.eq.s32.totalorder %s15, 1
    %p66 = por %p64, %p65
    %p67 = scmp.ne.s32.totalorder %s58, %s59
    %p68 = scmp.eq.s32.totalorder %s15, 0
    %p69 = por %p67, %p68
    %p70 = scmp.ne.s32.totalorder %s58, %s59
    %p71 = scmp.eq.s32.totalorder %s16, 1
    %p72 = por %p70, %p71
    %p74 = scmp.ne.s32.totalorder %s59, %s73
    %p75 = scmp.eq.s32.totalorder %s16, 0
    %p76 = por %p74, %p75
    %s78 = sadd.s32 %s77, 1
    %p81 = scmp.eq.s32.totalorder %s10, 1
    %p82 = scmp.ne.s32.totalorder %s77, %s79
    %p83 = scmp.eq.s32.totalorder %s10, 0
    %p84 = por %p82, %p83
    %p85 = scmp.ne.s32.totalorder %s77, %s79
    %p86 = scmp.eq.s32.totalorder %s15, 1
    %p87 = por %p85, %p86
    %p88 = scmp.ne.s32.totalorder %s79, %s80
    %p89 = scmp.eq.s32.totalorder %s15, 0
    %p90 = por %p88, %p89
    %p91 = scmp.ne.s32.totalorder %s79, %s80
    %p92 = scmp.eq.s32.totalorder %s16, 1
    %p93 = por %p91, %p92
    %p95 = scmp.ne.s32.totalorder %s80, %s94
    %p96 = scmp.eq.s32.totalorder %s16, 0
    %p97 = por %p95, %p96
    %s99 = sadd.s32 %s98, 1
    %p102 = scmp.eq.s32.totalorder %s10, 1
    %p103 = scmp.ne.s32.totalorder %s98, %s100
    %p104 = scmp.eq.s32.totalorder %s10, 0
    %p105 = por %p103, %p104
    %p106 = scmp.ne.s32.totalorder %s98, %s100
    %p107 = scmp.eq.s32.totalorder %s15, 1
    %p108 = por %p106, %p107
    %p109 = scmp.ne.s32.totalorder %s100, %s101
    %p110 = scmp.eq.s32.totalorder %s15, 0
    %p111 = por %p109, %p110
    %p112 = scmp.ne.s32.totalorder %s100, %s101
    %p113 = scmp.eq.s32.totalorder %s16, 1
    %p114 = por %p112, %p113
    %p116 = scmp.ne.s32.totalorder %s101, %s115
    %p117 = scmp.eq.s32.totalorder %s16, 0
    %p118 = por %p116, %p117
    %s119 = ssub.s32 %s17, %s29
    %s120 = ssub.s32 %s18, %s25
    %s121 = sor.u32 %s119, %s120
    %p122 = scmp.eq.s32.totalorder %s121, 0
    %s124 = sadd.s32 %s123, 1
    %s125 = scalar_select %p122, %s123, %s124
    %p128 = pneg %p122
    %p129 = scmp.eq.s32.totalorder %s10, 1
    %p130 = por %p128, %p129
    %p131 = scmp.ne.s32.totalorder %s123, %s126
    %p132 = scmp.eq.s32.totalorder %s10, 0
    %p133 = por %p131, %p132
    %p134 = scmp.ne.s32.totalorder %s123, %s126
    %p135 = scmp.eq.s32.totalorder %s15, 1
    %p136 = por %p134, %p135
    %p137 = scmp.ne.s32.totalorder %s126, %s127
    %p138 = scmp.eq.s32.totalorder %s15, 0
    %p139 = por %p137, %p138
    %p140 = scmp.ne.s32.totalorder %s126, %s127
    %p141 = scmp.eq.s32.totalorder %s16, 1
    %p142 = por %p140, %p141
    %p144 = scmp.ne.s32.totalorder %s127, %s143
    %p145 = scmp.eq.s32.totalorder %s16, 0
    %p146 = por %p144, %p145
    %p147 = scmp.le.s32.totalorder 1, %s10
    %p148 = scmp.lt.s32.totalorder %s10, 3
    %p149 = pnand %p147, %p148
    %p150 = pneg %p149
    // Predicated region
    $region9: #{conv_bn_m_forward.1} parent=5 // pred_check
      _
    $region10: #{conv_bn_m_forward.1} parent=5 // pred_check_branch
      %152 = sbr.rel (%p149) target = $region12
    $region11: #{conv_bn_m_forward.1} parent=5 // pred_region
      %s153 = ssub.s32 %s10, 1
      // Predicated region
      $region13: #{conv_bn_m_forward.1} parent=11 // pred_check
        %p154 = pneg %p69
      $region14: #{conv_bn_m_forward.1} parent=11 // pred_check_branch
        %156 = sbr.rel (%p154) target = $region16
      $region15: #{conv_bn_m_forward.1} parent=11 // pred_region
        _
      $region16: #{conv_bn_m_forward.1} parent=11 // pred_fallthru
        _
      // Predicated region
      $region17: #{conv_bn_m_forward.1} parent=11 // pred_check
        %p157 = pneg %p90
      $region18: #{conv_bn_m_forward.1} parent=11 // pred_check_branch
        %159 = sbr.rel (%p157) target = $region20
      $region19: #{conv_bn_m_forward.1} parent=11 // pred_region
        _
      $region20: #{conv_bn_m_forward.1} parent=11 // pred_fallthru
        _
      // Predicated region
      $region21: #{conv_bn_m_forward.1} parent=11 // pred_check
        %p160 = pneg %p111
      $region22: #{conv_bn_m_forward.1} parent=11 // pred_check_branch
        %162 = sbr.rel (%p160) target = $region24
      $region23: #{conv_bn_m_forward.1} parent=11 // pred_region
        _
      $region24: #{conv_bn_m_forward.1} parent=11 // pred_fallthru
        _
    $region12: #{conv_bn_m_forward.1} parent=5 // pred_fallthru
      _
    %p163 = scmp.lt.s32.totalorder %s10, 2
    // Predicated region
    $region25: #{conv_bn_m_forward.1} parent=5 // pred_check
      %p164 = pneg %p163
    $region26: #{conv_bn_m_forward.1} parent=5 // pred_check_branch
      %166 = sbr.rel (%p164) target = $region28
    $region27: #{conv_bn_m_forward.1} parent=5 // pred_region
      // Predicated region
      $region29: #{conv_bn_m_forward.1} parent=27 // pred_check
        %p167 = pneg %p42
      $region30: #{conv_bn_m_forward.1} parent=27 // pred_check_branch
        %169 = sbr.rel (%p167) target = $region32
      $region31: #{conv_bn_m_forward.1} parent=27 // pred_region
        %p170 = scmp.lt.s32.totalorder %s17, 1
        %s171 = scalar_select %p170, %s17, 1
        %s172 = smul.addr %s171, 8
        %s173 = smul.addr %s172, 4
        %s174 = scalar_lea.vmem %s0, %s173
      $region32: #{conv_bn_m_forward.1} parent=27 // pred_fallthru
        _
    $region28: #{conv_bn_m_forward.1} parent=5 // pred_fallthru
      _
    %p175 = scmp.le.s32.totalorder 1, %s10
    %p176 = scmp.lt.s32.totalorder %s10, 3
    %p177 = pnand %p175, %p176
    %p178 = pneg %p177
    // Predicated region
    $region33: #{conv_bn_m_forward.1} parent=5 // pred_check
      _
    $region34: #{conv_bn_m_forward.1} parent=5 // pred_check_branch
      %180 = sbr.rel (%p177) target = $region36
    $region35: #{conv_bn_m_forward.1} parent=5 // pred_region
      %s181 = ssub.s32 %s10, 1
      %p182 = scmp.lt.s32.totalorder %s19, 1
      %s183 = scalar_select %p182, %s19, 1
      %s184 = smul.addr %s183, 8
      %s185 = smul.addr %s184, 4
      %s186 = scalar_lea.vmem %s0, %s185
      %p187 = pneg %p48
      %p188 = pneg %p45
      %p189 = pneg %p69
      %p190 = pneg %p66
      %p191 = pneg %p90
      %p192 = pneg %p87
      %p193 = pneg %p111
      %p194 = pneg %p108
      %p195 = pneg %p139
      %p196 = pneg %p136
      %s197 = smul.u32 3, %s20
      %p198 = scmp.lt.s32.totalorder %s19, 1
      %s199 = scalar_select %p198, %s19, 1
      %p200 = scmp.lt.s32.totalorder %s197, 2
      %s201 = scalar_select %p200, %s197, 2
      %s202 = smul.addr %s199, 3
      %s203 = sadd.s32 %s201, %s202
      %s204 = smul.addr %s203, 4
      %s205 = scalar_lea.vmem %s4, %s204
      %p206 = scmp.lt.s32.totalorder %s19, 1
      %s207 = scalar_select %p206, %s19, 1
      %s208 = smul.addr %s207, 8
      %s209 = smul.addr %s208, 4
      %s210 = scalar_lea.vmem %s0, %s209
      %s211 = smul.u32 3, %s20
      %p212 = scmp.lt.s32.totalorder %s19, 1
      %s213 = scalar_select %p212, %s19, 1
      %p214 = scmp.lt.s32.totalorder %s211, 2
      %s215 = scalar_select %p214, %s211, 2
      %s216 = smul.addr %s213, 3
      %s217 = sadd.s32 %s215, %s216
      %s218 = smul.addr %s217, 4
      %s219 = scalar_lea.vmem %s4, %s218
      %s220 = smul.u32 3, %s20
      %v222 = vld [vmem:[%s210] sm:$0xff]
      %v223 = vld [vmem:[%s210 + $0x8] sm:$0xf]
      %v224 = vld [vmem:[%s210 + $0x10] sm:$0xff]
      %v225 = vld [vmem:[%s210 + $0x18] sm:$0xf]
      %v226 = vld [vmem:[%s210] sm:$0xff]
      %v227 = vld [vmem:[%s210 + $0x8] sm:$0xff]
      %v228 = vld [vmem:[%s210 + $0x10] sm:$0xff]
      %v229 = vld [vmem:[%s210 + $0x18] sm:$0xff]
      %v234 = vunpack.c.l.b16 %v222
      %v235 = vunpack.c.h.b16 %v222
      %v236 = vunpack.c.l.b16 %v223
      %v237 = vunpack.c.l.b16 %v224
      %v238 = vunpack.c.h.b16 %v224
      %v239 = vunpack.c.l.b16 %v225
      %v240 = vpack.c.b16 %v237, %v234
      %v241 = vpack.c.b16 %v238, %v235
      %v242 = vpack.c.b16 %v239, %v236
      %v250 = vunpack.c.l.b16 %v226
      %v251 = vunpack.c.h.b16 %v226
      %v252 = vunpack.c.l.b16 %v227
      %v253 = vunpack.c.h.b16 %v227
      %v254 = vunpack.c.l.b16 %v228
      %v255 = vunpack.c.h.b16 %v228
      %v256 = vunpack.c.l.b16 %v229
      %v257 = vunpack.c.h.b16 %v229
      %v258 = vpack.c.b16 %v254, %v250
      %v259 = vpack.c.b16 %v255, %v251
      %v260 = vpack.c.b16 %v256, %v252
      %v261 = vpack.c.b16 %v257, %v253
      %262 = vrot.lane.b32.xlu0 %v258, 127
      %v263 = vpop.permute.xlu0 %262
      %264 = vrot.lane.b32.xlu0 %v259, 127
      %v265 = vpop.permute.xlu0 %264
      %266 = vrot.lane.b32.xlu0 %v260, 127
      %v267 = vpop.permute.xlu0 %266
      %268 = vrot.lane.b32.xlu0 %v261, 127
      %v269 = vpop.permute.xlu0 %268
      %vm270 = vcmask 1039360
      %v271 = vsel %vm270, %v263, %v265
      %v272 = vsel %vm270, %v265, %v267
      %v273 = vsel %vm270, %v267, %v269
      %277 = vrot.lane.b32.xlu0 %v258, 126
      %v278 = vpop.permute.xlu0 %277
      %279 = vrot.lane.b32.xlu0 %v259, 126
      %v280 = vpop.permute.xlu0 %279
      %281 = vrot.lane.b32.xlu0 %v260, 126
      %v282 = vpop.permute.xlu0 %281
      %283 = vrot.lane.b32.xlu0 %v261, 126
      %v284 = vpop.permute.xlu0 %283
      %vm285 = vcmask 1031168
      %v286 = vsel %vm285, %v278, %v280
      %v287 = vsel %vm285, %v280, %v282
      %v288 = vsel %vm285, %v282, %v284
      %292 = vrot.lane.b32.xlu0 %v258, 110
      %v293 = vpop.permute.xlu0 %292
      %294 = vrot.lane.b32.xlu0 %v259, 110
      %v295 = vpop.permute.xlu0 %294
      %296 = vrot.lane.b32.xlu0 %v260, 110
      %v297 = vpop.permute.xlu0 %296
      %298 = vrot.lane.b32.xlu0 %v261, 110
      %v299 = vpop.permute.xlu0 %298
      %vm300 = vcmask 900096
      %v301 = vsel %vm300, %v293, %v295
      %v302 = vsel %vm300, %v295, %v297
      %v303 = vsel %vm300, %v297, %v299
      %307 = vrot.lane.b32.xlu0 %v258, 109
      %v308 = vpop.permute.xlu0 %307
      %309 = vrot.lane.b32.xlu0 %v259, 109
      %v310 = vpop.permute.xlu0 %309
      %311 = vrot.lane.b32.xlu0 %v260, 109
      %v312 = vpop.permute.xlu0 %311
      %313 = vrot.lane.b32.xlu0 %v261, 109
      %v314 = vpop.permute.xlu0 %313
      %vm315 = vcmask 891904
      %v316 = vsel %vm315, %v308, %v310
      %v317 = vsel %vm315, %v310, %v312
      %v318 = vsel %vm315, %v312, %v314
      %322 = vrot.lane.b32.xlu0 %v258, 108
      %v323 = vpop.permute.xlu0 %322
      %324 = vrot.lane.b32.xlu0 %v259, 108
      %v325 = vpop.permute.xlu0 %324
      %326 = vrot.lane.b32.xlu0 %v260, 108
      %v327 = vpop.permute.xlu0 %326
      %328 = vrot.lane.b32.xlu0 %v261, 108
      %v329 = vpop.permute.xlu0 %328
      %vm330 = vcmask 883712
      %v331 = vsel %vm330, %v323, %v325
      %v332 = vsel %vm330, %v325, %v327
      %v333 = vsel %vm330, %v327, %v329
      %337 = vrot.lane.b32.xlu0 %v258, 92
      %v338 = vpop.permute.xlu0 %337
      %339 = vrot.lane.b32.xlu0 %v259, 92
      %v340 = vpop.permute.xlu0 %339
      %341 = vrot.lane.b32.xlu0 %v260, 92
      %v342 = vpop.permute.xlu0 %341
      %343 = vrot.lane.b32.xlu0 %v261, 92
      %v344 = vpop.permute.xlu0 %343
      %vm345 = vcmask 752640
      %v346 = vsel %vm345, %v338, %v340
      %v347 = vsel %vm345, %v340, %v342
      %v348 = vsel %vm345, %v342, %v344
      %352 = vrot.lane.b32.xlu0 %v258, 91
      %v353 = vpop.permute.xlu0 %352
      %354 = vrot.lane.b32.xlu0 %v259, 91
      %v355 = vpop.permute.xlu0 %354
      %356 = vrot.lane.b32.xlu0 %v260, 91
      %v357 = vpop.permute.xlu0 %356
      %358 = vrot.lane.b32.xlu0 %v261, 91
      %v359 = vpop.permute.xlu0 %358
      %vm360 = vcmask 744448
      %v361 = vsel %vm360, %v353, %v355
      %v362 = vsel %vm360, %v355, %v357
      %v363 = vsel %vm360, %v357, %v359
      %367 = vrot.lane.b32.xlu0 %v258, 90
      %v368 = vpop.permute.xlu0 %367
      %369 = vrot.lane.b32.xlu0 %v259, 90
      %v370 = vpop.permute.xlu0 %369
      %371 = vrot.lane.b32.xlu0 %v260, 90
      %v372 = vpop.permute.xlu0 %371
      %373 = vrot.lane.b32.xlu0 %v261, 90
      %v374 = vpop.permute.xlu0 %373
      %vm375 = vcmask 736256
      %v376 = vsel %vm375, %v368, %v370
      %v377 = vsel %vm375, %v370, %v372
      %v378 = vsel %vm375, %v372, %v374
      %v382 = vld [vmem:[%s1] sm:$0xff]
      %v384 = vunpack.c.l.b16 %v382
      %v385 = vunpack.c.h.b16 %v382
      %v386 = vpack.c.b16 %v384, %v384
      %v387 = vpack.c.b16 %v385, %v385
      %vm389 = vcmask 130048
      %v391 = vsel %vm389, %v387, 0
      %393 = vmatprep.subr.bf16.mxu0 %v241
      %394 = vmatpush1.bf16.msra.mxu0 %v240
      %395 = vmatprep.subr.bf16.mxu0 %v272
      %396 = vmatpush1.bf16.msra.mxu0 %v271
      %397 = vmatprep.subr.bf16.mxu0 %v287
      %398 = vmatpush1.bf16.msra.mxu0 %v286
      %399 = vmatprep.subr.bf16.mxu0 %v302
      %400 = vmatpush1.bf16.msra.mxu0 %v301
      %401 = vmatprep.subr.bf16.mxu0 %v317
      %402 = vmatpush1.bf16.msra.mxu0 %v316
      %403 = vmatprep.subr.bf16.mxu0 %v332
      %404 = vmatpush1.bf16.msra.mxu0 %v331
      %405 = vmatprep.subr.bf16.mxu0 %v347
      %406 = vmatpush1.bf16.msra.mxu0 %v346
      %407 = vmatprep.subr.bf16.mxu0 %v362
      %408 = vmatpush1.bf16.msra.mxu0 %v361
      %409 = vmatprep.subr.bf16.mxu0 %v377
      %410 = vmatpush1.bf16.msra.mxu0 %v376
      %411 = vmatprep.subr.bf16.mxu0 0
      %412 = vmatpush1.bf16.msra.mxu0 0
      %413 = vmatprep.subr.bf16.mxu0 0
      %414 = vmatpush1.bf16.msra.mxu0 0
      %415 = vmatprep.subr.bf16.mxu0 0
      %416 = vmatpush1.bf16.msra.mxu0 0
      %417 = vmatprep.subr.bf16.mxu0 0
      %418 = vmatpush1.bf16.msra.mxu0 0
      %419 = vmatprep.subr.bf16.mxu0 0
      %420 = vmatpush1.bf16.msra.mxu0 0
      %421 = vmatprep.subr.bf16.mxu0 0
      %422 = vmatpush1.bf16.msra.mxu0 0
      %423 = vmatprep.subr.bf16.mxu0 0
      %424 = vmatpush1.bf16.msra.mxu0 0
      %425 = vmatprep.mubr.bf16.mxu0 %v391
      %426 = vmatmul.mubr.bf16.gmra.mrb[0].mxu0 %v386
      %v427 = vpop.f32.mrb[0].mxu0
      %v428 = vadd.f32 0.0, %v427
      %v429 = vpop.f32.mrb[0].mxu0
      %v430 = vadd.f32 0.0, %v429
      %v431 = vpop.f32.mrb[0].mxu0
      %v432 = vpop.f32.mrb[0].mxu0
      %433 = vdwg.mxu0
      %434 = vmatprep.subr.bf16.mxu0 0
      %435 = vmatpush1.bf16.msra.mxu0 %v242
      %436 = vmatprep.subr.bf16.mxu0 0
      %437 = vmatpush1.bf16.msra.mxu0 %v273
      %438 = vmatprep.subr.bf16.mxu0 0
      %439 = vmatpush1.bf16.msra.mxu0 %v288
      %440 = vmatprep.subr.bf16.mxu0 0
      %441 = vmatpush1.bf16.msra.mxu0 %v303
      %442 = vmatprep.subr.bf16.mxu0 0
      %443 = vmatpush1.bf16.msra.mxu0 %v318
      %444 = vmatprep.subr.bf16.mxu0 0
      %445 = vmatpush1.bf16.msra.mxu0 %v333
      %446 = vmatprep.subr.bf16.mxu0 0
      %447 = vmatpush1.bf16.msra.mxu0 %v348
      %448 = vmatprep.subr.bf16.mxu0 0
      %449 = vmatpush1.bf16.msra.mxu0 %v363
      %450 = vmatprep.subr.bf16.mxu0 0
      %451 = vmatpush1.bf16.msra.mxu0 %v378
      %452 = vmatprep.subr.bf16.mxu0 0
      %453 = vmatpush1.bf16.msra.mxu0 0
      %454 = vmatprep.subr.bf16.mxu0 0
      %455 = vmatpush1.bf16.msra.mxu0 0
      %456 = vmatprep.subr.bf16.mxu0 0
      %457 = vmatpush1.bf16.msra.mxu0 0
      %458 = vmatprep.subr.bf16.mxu0 0
      %459 = vmatpush1.bf16.msra.mxu0 0
      %460 = vmatprep.subr.bf16.mxu0 0
      %461 = vmatpush1.bf16.msra.mxu0 0
      %462 = vmatprep.subr.bf16.mxu0 0
      %463 = vmatpush1.bf16.msra.mxu0 0
      %464 = vmatprep.subr.bf16.mxu0 0
      %465 = vmatpush1.bf16.msra.mxu0 0
      %466 = vmatprep.mubr.bf16.mxu0 %v391
      %467 = vmatmul.mubr.bf16.gmra.mrb[0].mxu0 %v386
      %v468 = vpop.f32.mrb[0].mxu0
      %v469 = vadd.f32 0.0, %v468
      %v470 = vpop.f32.mrb[0].mxu0
      %v471 = vpop.f32.mrb[0].mxu0
      %v472 = vpop.f32.mrb[0].mxu0
      %473 = vdwg.mxu0
      %v474 = vld [vmem:[%s2] sm:$0xff]
      %476 = vset.pattern.permute.xlu0 0
      %477 = vperm.xlu0 %476, %v474
      %v478 = vpop.permute.xlu0 %477
      %v480 = vmul.f32 %v428, %v478
      %v481 = vmul.f32 %v430, %v478
      %v482 = vmul.f32 %v469, %v478
      %v483 = vld [vmem:[%s3] sm:$0xff]
      %485 = vset.pattern.permute.xlu0 0
      %486 = vperm.xlu0 %485, %v483
      %v487 = vpop.permute.xlu0 %486
      %v489 = vadd.f32 %v480, %v487
      %v490 = vadd.f32 %v481, %v487
      %v491 = vadd.f32 %v482, %v487
      %v492 = vmax.f32 %v489, 0.0
      %v493 = vmax.f32 %v490, 0.0
      %v494 = vmax.f32 %v491, 0.0
      %v495 = vpack.c.bf16 %v492, %v492
      %v496 = vpack.c.bf16 %v493, %v493
      %v497 = vpack.c.bf16 %v494, %v494
      %v501 = vunpack.c.l.b16 %v495
      %v502 = vunpack.c.l.b16 %v496
      %v503 = vunpack.c.l.b16 %v497
      %v504 = vpack.c.b16 %v502, %v501
      %v505 = vpack.c.b16 %v503, %v503
      %508 = vst [vmem:[%s219] sm:$0xff] %v504
      %509 = vst [vmem:[%s219 + $0x8] sm:$0xf] %v505
      %s510 = smul.u32 3, %s20
      %p511 = scmp.lt.s32.totalorder %s19, 1
      %s512 = scalar_select %p511, %s19, 1
      %p513 = scmp.lt.s32.totalorder %s510, 2
      %s514 = scalar_select %p513, %s510, 2
      %s515 = smul.addr %s512, 3
      %s516 = sadd.s32 %s514, %s515
      %s517 = smul.addr %s516, 4
      %s518 = scalar_lea.vmem %s4, %s517
      // Predicated region
      $region37: #{conv_bn_m_forward.1} parent=35 // pred_check
        %p519 = pneg %p136
      $region38: #{conv_bn_m_forward.1} parent=35 // pred_check_branch
        %521 = sbr.rel (%p519) target = $region40
      $region39: #{conv_bn_m_forward.1} parent=35 // pred_region
        %s522 = smul.u32 3, %s20
      $region40: #{conv_bn_m_forward.1} parent=35 // pred_fallthru
        _
    $region36: #{conv_bn_m_forward.1} parent=5 // pred_fallthru
      _
    %p523 = scmp.le.s32.totalorder 2, %s10
    // Predicated region
    $region41: #{conv_bn_m_forward.1} parent=5 // pred_check
      %p524 = pneg %p523
    $region42: #{conv_bn_m_forward.1} parent=5 // pred_check_branch
      %526 = sbr.rel (%p524) target = $region44
    $region43: #{conv_bn_m_forward.1} parent=5 // pred_region
      %s527 = ssub.s32 %s10, 2
      // Predicated region
      $region45: #{conv_bn_m_forward.1} parent=43 // pred_check
        %p528 = pneg %p142
      $region46: #{conv_bn_m_forward.1} parent=43 // pred_check_branch
        %530 = sbr.rel (%p528) target = $region48
      $region47: #{conv_bn_m_forward.1} parent=43 // pred_region
        %s531 = smul.u32 3, %s22
        %p532 = scmp.lt.s32.totalorder %s21, 1
        %s533 = scalar_select %p532, %s21, 1
        %p534 = scmp.lt.s32.totalorder %s531, 2
        %s535 = scalar_select %p534, %s531, 2
        %s536 = smul.addr %s533, 3
        %s537 = sadd.s32 %s535, %s536
        %s538 = smul.addr %s537, 4
        %s539 = scalar_lea.vmem %s4, %s538
      $region48: #{conv_bn_m_forward.1} parent=43 // pred_fallthru
        _
    $region44: #{conv_bn_m_forward.1} parent=5 // pred_fallthru
      _
  $region6: #{conv_bn_m_forward.1} parent=0 // loop_footer
    %s14 = sadd.s32 1, %s10
  $region7: #{conv_bn_m_forward.1} parent=0 // loop_footer_branch
    %9 = sbr.rel target = $region3
  $region8: #{conv_bn_m_forward.1} parent=0 // loop_exit
    _

</llo_original>
